<compile_context>
chip_gen: v5e
topology: v5e:2x2
jax: 0.10.0
libtpu: 0.0.40
codegen_flags: <defaults>
</compile_context>

<pallas_src>
import functools
import math

import numpy as np

import jax
import jax.numpy as jnp
from jax.experimental import pallas as pl
from jax.experimental.pallas import tpu as pltpu


def _round_up(x: int, m: int) -> int:
    return ((x + m - 1) // m) * m


def _pos_embed_kernel(hv_ref, rows_ref, w_ref, out_ref, *, use_mxu):
    """One grid step == one (batch, row-tile) slab.

    hv_ref:   (N * k_L,) SMEM int32  1 iff this tile contains any valid row
    rows_ref: (TL, 8)    VMEM f32    cols 0..2 = xyz, col 3 = valid flag, cols 4..7 = 0
    w_ref:    (8, Fpad)  VMEM f32    rows 0..2 = axis_scale/dim_t bands, row 3 = phase
    out_ref:  (TL, Fpad) VMEM        lane-dense (Fpad % 128 == 0) embedding tile
    """
    tile = pl.program_id(0) * pl.num_programs(1) + pl.program_id(1)
    has_valid = hv_ref[tile] != 0

    @pl.when(has_valid)
    def _():
        if use_mxu:
            # Affine term on the otherwise-idle MXU. HIGHEST keeps f32-level accuracy
            # (lower precision would truncate the folded scales toward bf16).
            arg = jnp.dot(rows_ref[...], w_ref[...],
                          preferred_element_type=jnp.float32,
                          precision=jax.lax.Precision.HIGHEST)
        else:
            # Exact-f32 VPU fallback: block-diagonal coord->feature expansion as four
            # broadcast multiply-adds (row 3 carries the phase, gated by the valid col).
            c = rows_ref[...]
            w = w_ref[...]
            arg = (c[:, 0:1] * w[0:1, :] + c[:, 1:2] * w[1:2, :]
                   + c[:, 2:3] * w[2:3, :] + c[:, 3:4] * w[3:4, :])
        # cos(x) = sin(x + pi/2); phase already folded into arg. Invalid/padded rows
        # and padded feature lanes have arg == 0 -> sin(0) == 0 (built-in masking).
        out_ref[...] = jnp.sin(arg).astype(out_ref.dtype)

    @pl.when(jnp.logical_not(has_valid))
    def _():
        # Tile of pure padding: skip the sin polynomial entirely, just memset.
        out_ref[...] = jnp.zeros_like(out_ref)


def _build_tables(coords_np, uids, counts, N, Lpad, TL, k_L):
    """Host-side scatter of sparse coords into dense per-batch rows (sort-based rank)."""
    b = coords_np[:, 0]
    bidx = np.searchsorted(uids, b)                 # compact batch slot (== id, contiguous)
    M = int(b.shape[0])
    order = np.argsort(bidx, kind="stable")         # stable => original order kept per batch
    starts = np.zeros(N, np.int64)
    starts[1:] = np.cumsum(counts[:-1])
    rank = np.empty(M, np.int64)
    rank[order] = np.arange(M, dtype=np.int64) - starts[bidx[order]]

    rows = np.zeros((N * Lpad, 8), np.float32)
    row_idx = bidx * Lpad + rank
    rows[row_idx, 0:3] = coords_np[:, 1:4].astype(np.float32)
    rows[row_idx, 3] = 1.0                          # valid flag (gates the phase row of W)
    rows = rows.reshape(N, Lpad, 8)

    # has_valid[b * k_L + l] == 1 iff row-tile l of batch b holds at least one real point.
    tile_starts = np.arange(k_L, dtype=np.int64) * TL
    has_valid = (tile_starts[None, :] < counts[:, None]).astype(np.int32).reshape(-1)
    return rows, has_valid


def position_embedding_sine(coords, spatial_shape, *, num_pos_feats=32,
                            temperature=10000.0, normalize=False, scale=None,
                            row_tile=8192, use_mxu=True, return_padded=False,
                            out_dtype=jnp.float32):
    """JAX/Pallas equivalent of PositionEmbeddingSine.forward(stensor).

    coords: [M, 4] int array (host numpy preferred) of (batch_id, x, y, z).
    Returns (N, max_len, 3 * num_pos_feats), matching the PyTorch output, unless
    return_padded=True, in which case the lane/sublane padded (N, Lpad, Fpad) kernel
    buffer is returned directly (zero post-kernel copies; padding is exact zeros).
    Batch ids must be contiguous 0..N-1 (same assumption the PyTorch code makes).
    """
    if scale is not None and not normalize:
        raise ValueError("normalize should be True if scale is passed")
    if scale is None:
        scale = 2.0 * math.pi
    F = int(num_pos_feats)
    assert F % 2 == 0, "num_pos_feats must be even (sin/cos interleave)"
    F3 = 3 * F
    Fpad = _round_up(F3, 128)                       # lane-dense feature axis

    # Output shape (N, max_len) is data dependent: derive it from a host copy of the
    # indices BEFORE building / transferring any dense data.
    coords_np = np.asarray(jax.device_get(coords)).astype(np.int64)
    uids, counts = np.unique(coords_np[:, 0], return_counts=True)
    N = int(uids.size)
    if not np.array_equal(uids, np.arange(N)):
        raise ValueError("batch ids must be contiguous 0..N-1 (the PyTorch module "
                         "indexes the output with the raw id and assumes the same)")
    max_len = int(counts.max())
    Lpad8 = _round_up(max_len, 8)

    # Row-tile size: as large as possible (amortize ~0.35us/grid-step overhead) while
    # the double-buffered output tile stays well under v5e's 16 MiB scoped-VMEM default.
    vmem_budget = 12 * 1024 * 1024
    tl_cap = max(8, (vmem_budget // (2 * 4 * Fpad)) // 8 * 8)
    tl_target = max(8, min(int(row_tile) // 8 * 8, tl_cap))

    k_L = -(-Lpad8 // tl_target)                    # tiles per batch (ceil)
    if N * k_L < 2 and Lpad8 >= 16:
        k_L = 2                                     # keep >=2 grid steps for v7x's 2 TCs
    TL = _round_up(-(-Lpad8 // k_L), 8)             # even tile size, multiple of 8
    Lpad = k_L * TL                                 # per-batch padded point axis

    rows, has_valid = _build_tables(coords_np, uids, counts, N, Lpad, TL, k_L)

    # Fold per-axis normalize scale, 1/dim_t and the cos phase into one table:
    #   W[a, a*F:(a+1)*F] = axis_scale[a] / dim_t         (a = 0..2)
    #   W[3, f]           = pi/2 for odd f < 3F           (gated by the valid column)
    inv_dim_t = 1.0 / (temperature ** (2.0 * (np.arange(F, dtype=np.float64) // 2) / F))
    if normalize:
        eps = 1e-6
        axis_scale = np.array([scale / (float(s) - 1.0 + eps) for s in spatial_shape],
                              np.float64)
    else:
        axis_scale = np.ones(3, np.float64)
    w = np.zeros((8, Fpad), np.float32)
    for a in range(3):
        w[a, a * F:(a + 1) * F] = (axis_scale[a] * inv_dim_t).astype(np.float32)
    w[3, 1:F3:2] = np.float32(math.pi / 2.0)        # cos(x) = sin(x + pi/2)

    kernel = functools.partial(_pos_embed_kernel, use_mxu=use_mxu)
    out = pl.pallas_call(
        kernel,
        out_shape=jax.ShapeDtypeStruct((N, Lpad, Fpad), out_dtype),
        grid_spec=pltpu.PrefetchScalarGridSpec(
            num_scalar_prefetch=1,
            grid=(N, k_L),
            in_specs=[
                pl.BlockSpec((None, TL, 8), lambda b, l, hv: (b, l, 0)),
                pl.BlockSpec((8, Fpad), lambda b, l, hv: (0, 0)),
            ],
            out_specs=pl.BlockSpec((None, TL, Fpad), lambda b, l, hv: (b, l, 0)),
        ),
        compiler_params=pltpu.CompilerParams(
            dimension_semantics=("parallel", "parallel")),
    )(jnp.asarray(has_valid), jnp.asarray(rows), jnp.asarray(w))

    if return_padded:
        return out                                  # zero post-kernel copies
    # Exact PyTorch output shape; single XLA slice (a no-op when shapes already match).
    return out[:, :max_len, :F3]


def _reference(coords_np, spatial_shape, num_pos_feats, temperature, normalize, scale):
    """Pure-numpy (float64) port of the PyTorch forward for verification."""
    F = num_pos_feats
    if scale is None:
        scale = 2.0 * math.pi
    dim_t = temperature ** (2.0 * (np.arange(F) // 2) / F)
    axis_scale = np.ones(3, np.float64)
    if normalize:
        eps = 1e-6
        axis_scale = np.array([scale / (s - 1 + eps) for s in spatial_shape], np.float64)
    uids = np.unique(coords_np[:, 0])
    N = uids.size
    max_len = max(int((coords_np[:, 0] == bid).sum()) for bid in uids)
    pos = np.zeros((N, max_len, 3 * F), np.float32)
    for j, bid in enumerate(uids):
        m = coords_np[:, 0] == bid
        cur = coords_np[m][:, 1:4].astype(np.float64)
        L = cur.shape[0]
        for a in range(3):
            p = (cur[:, a] * axis_scale[a])[:, None] / dim_t[None, :]
            emb = np.empty_like(p)
            emb[:, 0::2] = np.sin(p[:, 0::2])
            emb[:, 1::2] = np.cos(p[:, 1::2])
            pos[j, :L, a * F:(a + 1) * F] = emb
    return pos


if __name__ == "__main__":
    key = jax.random.PRNGKey(0)
    spatial_shape = (16, 16, 16)
    num_pos_feats = 32
    temperature = 10000.0

    # Case 1: small problem, one row tile per batch (default big-tile path).
    # Case 2: skewed batches with a forced small row_tile -> multiple tiles per batch,
    #         exercising the dead-tile memset branch and the multi-tile grid.
    cases = [
        (dict(), [10, 6]),
        (dict(row_tile=16), [40, 6]),
    ]

    coords = None
    for extra_kwargs, per_batch in cases:
        M = sum(per_batch)
        batch_col = np.concatenate(
            [np.full(c, b, np.int32) for b, c in enumerate(per_batch)])[:, None]
        key, sub = jax.random.split(key)
        xyz = np.asarray(jax.random.randint(sub, (M, 3), 0, spatial_shape[0],
                                            dtype=jnp.int32))
        coords = np.concatenate([batch_col, xyz], axis=1)        # [M, 4], host-side

        for normalize in (False, True):
            for use_mxu in (True, False):
                out = position_embedding_sine(
                    coords, spatial_shape, num_pos_feats=num_pos_feats,
                    temperature=temperature, normalize=normalize, use_mxu=use_mxu,
                    **extra_kwargs)
                out = jax.block_until_ready(out)
                ref = _reference(coords, spatial_shape, num_pos_feats, temperature,
                                 normalize, None)
                assert out.shape == ref.shape, (out.shape, ref.shape)
                np.testing.assert_allclose(np.asarray(out), ref, rtol=1e-5, atol=1e-5)

    # Padded fast path: no post-kernel copy; padded rows/lanes are exact zeros.
    out_pad = position_embedding_sine(coords, spatial_shape,
                                      num_pos_feats=num_pos_feats,
                                      temperature=temperature, normalize=True,
                                      return_padded=True, row_tile=16)
    out_pad = jax.block_until_ready(out_pad)
    ref = _reference(coords, spatial_shape, num_pos_feats, temperature, True, None)
    np.testing.assert_allclose(
        np.asarray(out_pad)[:, :ref.shape[1], :ref.shape[2]], ref,
        rtol=1e-5, atol=1e-5)
    np.testing.assert_allclose(
        np.asarray(out_pad)[:, ref.shape[1]:, :], 0.0, atol=0.0)

    print("KERNEL_OK")
</pallas_src>

<mosaic_0001>
module attributes {stable_mosaic.version = 11 : i64} {
  func.func @_pos_embed_kernel(%arg0: i32, %arg1: i32, %arg2: memref<2xi32, #tpu.memory_space<smem>>, %arg3: memref<1x16x8xf32, #tpu.memory_space<vmem>>, %arg4: memref<8x128xf32, #tpu.memory_space<vmem>>, %arg5: memref<1x16x128xf32, #tpu.memory_space<vmem>>) attributes {dimension_semantics = [#tpu.dimension_semantics<parallel>, #tpu.dimension_semantics<parallel>], iteration_bounds = array<i64: 2, 1>, scalar_prefetch = 1 : i64, scratch_operands = 0 : i64, tpu.core_type = #tpu.core_type<tc>, window_params = [{transform_indices = @transform_0, window_bounds = array<i64: 1, 16, 8>}, {pipeline_mode = #tpu.pipeline_mode<synchronous>, transform_indices = @transform_1, window_bounds = array<i64: 8, 128>}, {transform_indices = @transform_2, window_bounds = array<i64: 1, 16, 128>}]} {
    %c1_i32 = arith.constant 1 : i32
    %0 = arith.muli %arg0, %c1_i32 : i32
    %1 = arith.addi %0, %arg1 : i32
    %2 = arith.index_cast %1 : i32 to index
    %3 = memref.load %arg2[%2] : memref<2xi32, #tpu.memory_space<smem>>
    %c0_i32 = arith.constant 0 : i32
    %4 = arith.cmpi ne, %3, %c0_i32 : i32
    %5 = arith.extui %4 : i1 to i32
    %c0_i32_0 = arith.constant 0 : i32
    %6 = arith.cmpi ne, %5, %c0_i32_0 : i32
    scf.if %6 {
      %c0 = arith.constant 0 : index
      %c0_2 = arith.constant 0 : index
      %c0_3 = arith.constant 0 : index
      %10 = vector.load %arg3[%c0, %c0_2, %c0_3] : memref<1x16x8xf32, #tpu.memory_space<vmem>>, vector<1x16x8xf32>
      %11 = vector.shape_cast %10 : vector<1x16x8xf32> to vector<16x8xf32>
      %c0_4 = arith.constant 0 : index
      %c0_5 = arith.constant 0 : index
      %12 = vector.load %arg4[%c0_4, %c0_5] : memref<8x128xf32, #tpu.memory_space<vmem>>, vector<8x128xf32>
      %cst = arith.constant dense<0.000000e+00> : vector<16x128xf32>
      %13 = tpu.matmul %11, %12, %cst {dimension_numbers = #tpu.dot_dimension_numbers<[1], [0], [0], [1], [0, 0, 1, 1], [], []>, precision = #tpu.contract_precision<fp32>} : vector<16x8xf32>, vector<8x128xf32>, vector<16x128xf32> -> vector<16x128xf32>
      %14 = math.sin %13 : vector<16x128xf32>
      %c0_6 = arith.constant 0 : index
      %c0_7 = arith.constant 0 : index
      %c0_8 = arith.constant 0 : index
      %15 = vector.load %arg5[%c0_6, %c0_7, %c0_8] : memref<1x16x128xf32, #tpu.memory_space<vmem>>, vector<1x16x128xf32>
      %16 = vector.shape_cast %15 : vector<1x16x128xf32> to vector<16x128xf32>
      %17 = vector.shape_cast %14 : vector<16x128xf32> to vector<1x16x128xf32>
      tpu.vector_store %arg5[%c0_6, %c0_7, %c0_8], %17 {strides = array<i32>} : memref<1x16x128xf32, #tpu.memory_space<vmem>>, vector<1x16x128xf32>,
    } else {
    }
    %true = arith.constant true
    %7 = arith.xori %4, %true : i1
    %8 = arith.extui %7 : i1 to i32
    %c0_i32_1 = arith.constant 0 : i32
    %9 = arith.cmpi ne, %8, %c0_i32_1 : i32
    scf.if %9 {
      %cst = arith.constant 0.000000e+00 : f32
      %10 = vector.broadcast %cst : f32 to vector<16x128xf32>
      %c0 = arith.constant 0 : index
      %c0_2 = arith.constant 0 : index
      %c0_3 = arith.constant 0 : index
      %11 = vector.load %arg5[%c0, %c0_2, %c0_3] : memref<1x16x128xf32, #tpu.memory_space<vmem>>, vector<1x16x128xf32>
      %12 = vector.shape_cast %11 : vector<1x16x128xf32> to vector<16x128xf32>
      %13 = vector.shape_cast %10 : vector<16x128xf32> to vector<1x16x128xf32>
      tpu.vector_store %arg5[%c0, %c0_2, %c0_3], %13 {strides = array<i32>} : memref<1x16x128xf32, #tpu.memory_space<vmem>>, vector<1x16x128xf32>,
    } else {
    }
    return
  }
  func.func @transform_0(%arg0: i32, %arg1: i32, %arg2: memref<2xi32, #tpu.memory_space<smem>>) -> (i32, i32, i32) {
    %c0_i32 = arith.constant 0 : i32
    %c0_i32_0 = arith.constant 0 : i32
    return %arg0, %arg1, %c0_i32 : i32, i32, i32
  }
  func.func @transform_1(%arg0: i32, %arg1: i32, %arg2: memref<2xi32, #tpu.memory_space<smem>>) -> (i32, i32) {
    %c0_i32 = arith.constant 0 : i32
    %c0_i32_0 = arith.constant 0 : i32
    %c0_i32_1 = arith.constant 0 : i32
    return %c0_i32, %c0_i32_0 : i32, i32
  }
  func.func @transform_2(%arg0: i32, %arg1: i32, %arg2: memref<2xi32, #tpu.memory_space<smem>>) -> (i32, i32, i32) {
    %c0_i32 = arith.constant 0 : i32
    %c0_i32_0 = arith.constant 0 : i32
    return %arg0, %arg1, %c0_i32 : i32, i32, i32
  }
}

</mosaic_0001>

<llo_original>
// kernel: tpu_custom_call.1
$region0: #{tpu_custom_call.1}
  #allocation0 [shape = 'u32[]', space=smem, size = 0x4, offset = 0x4, fixed_abs, tag = 'smem constant byte address 0x4 - core index']
  #allocation1 [shape = 'u32[72,128]{1,0:T(1,128)}', space=vmem, size = 0x9000, scoped, tag = 'internal scratch']
  #allocation2 [shape = 's32[1]{0}', space=sflag, size = 0x4, scoped, tag = 'scoped memory for tpu_custom_call.1']
  #allocation3 [shape = 'u8[512]{0}', space=smem, size = 0x200, scoped, tag = 'prefetched SMEM operand 0']
  %s0 = inlined_call_operand.vmem [shape: s32[2], index: 0, kind: input, shape index: {}]
  %s1 = inlined_call_operand.vmem [shape: f32[2,16,8], index: 1, kind: input, shape index: {}]
  %s2 = inlined_call_operand.vmem [shape: f32[8,128], index: 2, kind: input, shape index: {}]
  %s3 = inlined_call_operand.hbm [shape: f32[2,16,128], index: 3, kind: output, shape index: {}]
  %s4 = sld [smem:[#allocation0]]
  $region49: #{tpu_custom_call.1} parent=0
    _
  %s6 = ssub.s32 1, %s4
  %s7 = scalar_select 0, %s6, %s4
  %s9 = sshll.u32 %s0, 4
  %s10 = int_to_ptr.vmem [resolvable:$true] %s9
  %12 = dma.vmem_to_smem %s10, 16, [#allocation3], [#allocation2]
  %14 = dma.done [#allocation2], 16
  %15 = sfence
  $region1: #{tpu_custom_call.1} parent=0
    #allocation4 [shape = 'u8[16384]{0}', space=vmem, size = 0x4000, scoped, tag = 'output window, operand 0']
    #allocation5 [shape = 's32[2]{0}', space=sflag, size = 0x8, scoped, tag = 'scoped memory for tpu_custom_call.1']
    %16 = vsyncpa [#allocation5], 0
    %s17 = scalar_lea.sflag [#allocation5], 1
    %18 = vsyncpa %s17, 0
    loop: start=0, step=1, limit=4
    $region2: #{tpu_custom_call.1} parent=1 // loop_pre_header
      _
    $region3: #{tpu_custom_call.1} parent=1 // loop_header
      %s20 = sphi 0, %s24
      %p21 = scmp.ge.s32.totalorder %s20, 4
      %s27 = sphi 0, %s39
      %s28 = sphi 0, %s35
      %s29 = sphi 0, %s27
      %s30 = sphi 0, %s28
      %s31 = sphi 0, %s29
      %s32 = sphi 0, %s30
      %s44 = sphi 0, %s46
      %s47 = sphi 0, %s44
      %s48 = sphi 0, %s47
      %s64 = sphi 0, %s48
      %s68 = sphi 0, %s68
      %s70 = sphi 0, %s68
      %s71 = sphi 0, %s70
      %s85 = sphi 0, %s71
      %s93 = sphi 0, %s95
      %s96 = sphi 0, %s93
      %s97 = sphi 0, %s96
      %s113 = sphi 0, %s97
    $region4: #{tpu_custom_call.1} parent=1 // loop_header_branch
      %23 = sbr.rel (%p21) target = $region8
    $region5: #{tpu_custom_call.1} parent=1 // loop_body
      %s25 = ssub.s32 %s20, 1
      %s26 = ssub.s32 %s20, 2
      %s33 = sadd.s32 1, %s28
      %p34 = scmp.ge.s32.totalorder %s33, 1
      %s35 = scalar_select %p34, 0, %s33
      %s36 = sadd.s32 1, %s27
      %s37 = scalar_select %p34, %s36, %s27
      %p38 = scmp.ge.s32.totalorder %s37, 2
      %s39 = scalar_select %p38, 0, %s37
      %s40 = ssub.s32 %s27, %s39
      %s41 = ssub.s32 %s28, %s35
      %s42 = sor.u32 %s40, %s41
      %p43 = scmp.eq.s32.totalorder %s42, 0
      %s45 = sadd.s32 %s44, 1
      %s46 = scalar_select %p43, %s44, %s45
      %p49 = pneg %p43
      %p50 = scmp.eq.s32.totalorder %s20, 1
      %p51 = por %p49, %p50
      %p52 = scmp.ne.s32.totalorder %s44, %s47
      %p53 = scmp.eq.s32.totalorder %s20, 0
      %p54 = por %p52, %p53
      %p55 = scmp.ne.s32.totalorder %s44, %s47
      %p56 = scmp.eq.s32.totalorder %s25, 1
      %p57 = por %p55, %p56
      %p58 = scmp.ne.s32.totalorder %s47, %s48
      %p59 = scmp.eq.s32.totalorder %s25, 0
      %p60 = por %p58, %p59
      %p61 = scmp.ne.s32.totalorder %s47, %s48
      %p62 = scmp.eq.s32.totalorder %s26, 1
      %p63 = por %p61, %p62
      %p65 = scmp.ne.s32.totalorder %s48, %s64
      %p66 = scmp.eq.s32.totalorder %s26, 0
      %p67 = por %p65, %p66
      %s69 = sadd.s32 %s68, 1
      %p72 = scmp.eq.s32.totalorder %s20, 1
      %p73 = scmp.ne.s32.totalorder %s68, %s70
      %p74 = scmp.eq.s32.totalorder %s20, 0
      %p75 = por %p73, %p74
      %p76 = scmp.ne.s32.totalorder %s68, %s70
      %p77 = scmp.eq.s32.totalorder %s25, 1
      %p78 = por %p76, %p77
      %p79 = scmp.ne.s32.totalorder %s70, %s71
      %p80 = scmp.eq.s32.totalorder %s25, 0
      %p81 = por %p79, %p80
      %p82 = scmp.ne.s32.totalorder %s70, %s71
      %p83 = scmp.eq.s32.totalorder %s26, 1
      %p84 = por %p82, %p83
      %p86 = scmp.ne.s32.totalorder %s71, %s85
      %p87 = scmp.eq.s32.totalorder %s26, 0
      %p88 = por %p86, %p87
      %s89 = ssub.s32 %s27, %s39
      %s90 = ssub.s32 %s28, %s35
      %s91 = sor.u32 %s89, %s90
      %p92 = scmp.eq.s32.totalorder %s91, 0
      %s94 = sadd.s32 %s93, 1
      %s95 = scalar_select %p92, %s93, %s94
      %p98 = pneg %p92
      %p99 = scmp.eq.s32.totalorder %s20, 1
      %p100 = por %p98, %p99
      %p101 = scmp.ne.s32.totalorder %s93, %s96
      %p102 = scmp.eq.s32.totalorder %s20, 0
      %p103 = por %p101, %p102
      %p104 = scmp.ne.s32.totalorder %s93, %s96
      %p105 = scmp.eq.s32.totalorder %s25, 1
      %p106 = por %p104, %p105
      %p107 = scmp.ne.s32.totalorder %s96, %s97
      %p108 = scmp.eq.s32.totalorder %s25, 0
      %p109 = por %p107, %p108
      %p110 = scmp.ne.s32.totalorder %s96, %s97
      %p111 = scmp.eq.s32.totalorder %s26, 1
      %p112 = por %p110, %p111
      %p114 = scmp.ne.s32.totalorder %s97, %s113
      %p115 = scmp.eq.s32.totalorder %s26, 0
      %p116 = por %p114, %p115
      %p117 = scmp.le.s32.totalorder 1, %s20
      %p118 = scmp.lt.s32.totalorder %s20, 3
      %p119 = pnand %p117, %p118
      %p120 = pneg %p119
      // Predicated region
      $region9: #{tpu_custom_call.1} parent=5 // pred_check
        _
      $region10: #{tpu_custom_call.1} parent=5 // pred_check_branch
        %122 = sbr.rel (%p119) target = $region12
      $region11: #{tpu_custom_call.1} parent=5 // pred_region
        %s123 = ssub.s32 %s20, 1
        // Predicated region
        $region13: #{tpu_custom_call.1} parent=11 // pred_check
          %p124 = pneg %p81
        $region14: #{tpu_custom_call.1} parent=11 // pred_check_branch
          %126 = sbr.rel (%p124) target = $region16
        $region15: #{tpu_custom_call.1} parent=11 // pred_region
          _
        $region16: #{tpu_custom_call.1} parent=11 // pred_fallthru
          _
      $region12: #{tpu_custom_call.1} parent=5 // pred_fallthru
        _
      %p127 = scmp.lt.s32.totalorder %s20, 2
      // Predicated region
      $region17: #{tpu_custom_call.1} parent=5 // pred_check
        %p128 = pneg %p127
      $region18: #{tpu_custom_call.1} parent=5 // pred_check_branch
        %130 = sbr.rel (%p128) target = $region20
      $region19: #{tpu_custom_call.1} parent=5 // pred_region
        // Predicated region
        $region21: #{tpu_custom_call.1} parent=19 // pred_check
          %p131 = pneg %p54
        $region22: #{tpu_custom_call.1} parent=19 // pred_check_branch
          %133 = sbr.rel (%p131) target = $region24
        $region23: #{tpu_custom_call.1} parent=19 // pred_region
          %s134 = smul.u32 2, %s28
          %p135 = scmp.lt.s32.totalorder %s27, 1
          %s136 = scalar_select %p135, %s27, 1
          %p137 = scmp.lt.s32.totalorder %s134, 1
          %s138 = scalar_select %p137, %s134, 1
          %s139 = smul.addr %s136, 2
          %s140 = sadd.s32 %s138, %s139
          %s141 = smul.addr %s140, 8
          %s142 = scalar_lea.vmem %s1, %s141
          %s143 = smul.u32 2, %s28
        $region24: #{tpu_custom_call.1} parent=19 // pred_fallthru
          _
      $region20: #{tpu_custom_call.1} parent=5 // pred_fallthru
        _
      %p144 = scmp.le.s32.totalorder 1, %s20
      %p145 = scmp.lt.s32.totalorder %s20, 3
      %p146 = pnand %p144, %p145
      %p147 = pneg %p146
      // Predicated region
      $region25: #{tpu_custom_call.1} parent=5 // pred_check
        _
      $region26: #{tpu_custom_call.1} parent=5 // pred_check_branch
        %149 = sbr.rel (%p146) target = $region28
      $region27: #{tpu_custom_call.1} parent=5 // pred_region
        %s150 = ssub.s32 %s20, 1
        %s151 = smul.u32 2, %s30
        %p152 = scmp.lt.s32.totalorder %s29, 1
        %s153 = scalar_select %p152, %s29, 1
        %p154 = scmp.lt.s32.totalorder %s151, 1
        %s155 = scalar_select %p154, %s151, 1
        %s156 = smul.addr %s153, 2
        %s157 = sadd.s32 %s155, %s156
        %s158 = smul.addr %s157, 8
        %s159 = scalar_lea.vmem %s1, %s158
        %p160 = pneg %p60
        %p161 = pneg %p57
        %p162 = pneg %p81
        %p163 = pneg %p78
        %p164 = pneg %p109
        %p165 = pneg %p106
        %s166 = sand.u32 %s96, 1
        %s167 = scalar_lea.sflag [#allocation5], %s166
        %s168 = sand.u32 %s96, 1
        %s169 = smul.addr %s168, 16
        %s170 = scalar_lea.vmem [#allocation4], %s169
        %s171 = smul.u32 2, %s30
        %p172 = scmp.lt.s32.totalorder %s29, 1
        %s173 = scalar_select %p172, %s29, 1
        %p174 = scmp.lt.s32.totalorder %s171, 1
        %s175 = scalar_select %p174, %s171, 1
        %s176 = smul.addr %s173, 2
        %s177 = sadd.s32 %s175, %s176
        %s178 = smul.addr %s177, 8
        %s179 = scalar_lea.vmem %s1, %s178
        %s180 = smul.u32 2, %s30
        %s181 = smul.u32 2, %s30
        %s182 = sadd.s32 %s29, %s30
        %s183 = sld [smem:[#allocation3 + %s182]]
        %p184 = scmp.ne.s32.totalorder %s183, 0
        // Predicated region
        $region29: #{tpu_custom_call.1} parent=27 // pred_check
          %p185 = pneg %p184
        $region30: #{tpu_custom_call.1} parent=27 // pred_check_branch
          %187 = sbr.rel (%p185) target = $region32
        $region31: #{tpu_custom_call.1} parent=27 // pred_region
          %v188 = vld [vmem:[%s179] sm:$0xff]
          %v189 = vld [vmem:[%s179 + $0x8] sm:$0xff]
          %v190 = vld [vmem:[%s2] sm:$0xff]
          %vm191 = vcmask 64512
          %v193 = vsel %vm191, %v188, 0
          %v196 = vsel %vm191, %v189, 0
          %198 = vmatpush.msra.mxu0 0.0
          %199 = vmatpush.msra.mxu0 0.0
          %200 = vmatpush.msra.mxu0 0.0
          %201 = vmatpush.msra.mxu0 0.0
          %202 = vmatpush.msra.mxu0 0.0
          %203 = vmatpush.msra.mxu0 0.0
          %204 = vmatpush.msra.mxu0 0.0
          %205 = vmatpush.msra.mxu0 0.0
          %206 = vmatpush.msra.mxu0 0.0
          %207 = vmatpush.msra.mxu0 0.0
          %208 = vmatpush.msra.mxu0 0.0
          %209 = vmatpush.msra.mxu0 0.0
          %210 = vmatpush.msra.mxu0 0.0
          %211 = vmatpush.msra.mxu0 0.0
          %212 = vmatpush.msra.mxu0 0.0
          %v213 = vand.u32 %v190, 4294901760
          %214 = vmatpush.msra.mxu0 %v213
          %v215 = vand.u32 %v193, 4294901760
          %v216 = vsub.f32 %v193, %v215
          %v217 = vand.u32 %v216, 4294901760
          %v218 = vsub.f32 %v216, %v217
          %v219 = vand.u32 %v218, 4294901760
          %220 = vmatmul.f32.gmra.mxu0 %v219
          %v221 = vpop.f32.mrf.mxu0
          %v222 = vadd.f32 0.0, %v221
          %v223 = vand.u32 %v196, 4294901760
          %v224 = vsub.f32 %v196, %v223
          %v225 = vand.u32 %v224, 4294901760
          %v226 = vsub.f32 %v224, %v225
          %v227 = vand.u32 %v226, 4294901760
          %228 = vmatmul.f32.gmra.mxu0 %v227
          %v229 = vpop.f32.mrf.mxu0
          %v230 = vadd.f32 0.0, %v229
          %231 = vdwg.mxu0
          %232 = vmatpush.msra.mxu0 0.0
          %233 = vmatpush.msra.mxu0 0.0
          %234 = vmatpush.msra.mxu0 0.0
          %235 = vmatpush.msra.mxu0 0.0
          %236 = vmatpush.msra.mxu0 0.0
          %237 = vmatpush.msra.mxu0 0.0
          %238 = vmatpush.msra.mxu0 0.0
          %239 = vmatpush.msra.mxu0 0.0
          %240 = vmatpush.msra.mxu0 0.0
          %241 = vmatpush.msra.mxu0 0.0
          %242 = vmatpush.msra.mxu0 0.0
          %243 = vmatpush.msra.mxu0 0.0
          %244 = vmatpush.msra.mxu0 0.0
          %245 = vmatpush.msra.mxu0 0.0
          %246 = vmatpush.msra.mxu0 0.0
          %v247 = vand.u32 %v190, 4294901760
          %v248 = vsub.f32 %v190, %v247
          %v249 = vand.u32 %v248, 4294901760
          %v250 = vsub.f32 %v248, %v249
          %v251 = vand.u32 %v250, 4294901760
          %252 = vmatpush.msra.mxu0 %v251
          %v253 = vand.u32 %v193, 4294901760
          %254 = vmatmul.f32.gmra.mxu0 %v253
          %v255 = vpop.f32.mrf.mxu0
          %v256 = vadd.f32 %v222, %v255
          %v257 = vand.u32 %v196, 4294901760
          %258 = vmatmul.f32.gmra.mxu0 %v257
          %v259 = vpop.f32.mrf.mxu0
          %v260 = vadd.f32 %v230, %v259
          %261 = vdwg.mxu0
          %262 = vmatpush.msra.mxu0 0.0
          %263 = vmatpush.msra.mxu0 0.0
          %264 = vmatpush.msra.mxu0 0.0
          %265 = vmatpush.msra.mxu0 0.0
          %266 = vmatpush.msra.mxu0 0.0
          %267 = vmatpush.msra.mxu0 0.0
          %268 = vmatpush.msra.mxu0 0.0
          %269 = vmatpush.msra.mxu0 0.0
          %270 = vmatpush.msra.mxu0 0.0
          %271 = vmatpush.msra.mxu0 0.0
          %272 = vmatpush.msra.mxu0 0.0
          %273 = vmatpush.msra.mxu0 0.0
          %274 = vmatpush.msra.mxu0 0.0
          %275 = vmatpush.msra.mxu0 0.0
          %276 = vmatpush.msra.mxu0 0.0
          %v277 = vand.u32 %v190, 4294901760
          %v278 = vsub.f32 %v190, %v277
          %279 = vmatpush.msra.mxu0 %v278
          %v280 = vand.u32 %v193, 4294901760
          %v281 = vsub.f32 %v193, %v280
          %282 = vmatmul.f32.gmra.mxu0 %v281
          %v283 = vpop.f32.mrf.mxu0
          %v284 = vadd.f32 %v256, %v283
          %v285 = vand.u32 %v196, 4294901760
          %v286 = vsub.f32 %v196, %v285
          %287 = vmatmul.f32.gmra.mxu0 %v286
          %v288 = vpop.f32.mrf.mxu0
          %v289 = vadd.f32 %v260, %v288
          %290 = vdwg.mxu0
          %291 = vmatpush.msra.mxu0 0.0
          %292 = vmatpush.msra.mxu0 0.0
          %293 = vmatpush.msra.mxu0 0.0
          %294 = vmatpush.msra.mxu0 0.0
          %295 = vmatpush.msra.mxu0 0.0
          %296 = vmatpush.msra.mxu0 0.0
          %297 = vmatpush.msra.mxu0 0.0
          %298 = vmatpush.msra.mxu0 0.0
          %299 = vmatpush.msra.mxu0 0.0
          %300 = vmatpush.msra.mxu0 0.0
          %301 = vmatpush.msra.mxu0 0.0
          %302 = vmatpush.msra.mxu0 0.0
          %303 = vmatpush.msra.mxu0 0.0
          %304 = vmatpush.msra.mxu0 0.0
          %305 = vmatpush.msra.mxu0 0.0
          %v306 = vand.u32 %v190, 4294901760
          %307 = vmatpush.msra.mxu0 %v306
          %v308 = vand.u32 %v193, 4294901760
          %v309 = vsub.f32 %v193, %v308
          %v310 = vand.u32 %v309, 4294901760
          %311 = vmatmul.f32.gmra.mxu0 %v310
          %v312 = vpop.f32.mrf.mxu0
          %v313 = vadd.f32 %v284, %v312
          %v314 = vand.u32 %v196, 4294901760
          %v315 = vsub.f32 %v196, %v314
          %v316 = vand.u32 %v315, 4294901760
          %317 = vmatmul.f32.gmra.mxu0 %v316
          %v318 = vpop.f32.mrf.mxu0
          %v319 = vadd.f32 %v289, %v318
          %320 = vdwg.mxu0
          %321 = vmatpush.msra.mxu0 0.0
          %322 = vmatpush.msra.mxu0 0.0
          %323 = vmatpush.msra.mxu0 0.0
          %324 = vmatpush.msra.mxu0 0.0
          %325 = vmatpush.msra.mxu0 0.0
          %326 = vmatpush.msra.mxu0 0.0
          %327 = vmatpush.msra.mxu0 0.0
          %328 = vmatpush.msra.mxu0 0.0
          %329 = vmatpush.msra.mxu0 0.0
          %330 = vmatpush.msra.mxu0 0.0
          %331 = vmatpush.msra.mxu0 0.0
          %332 = vmatpush.msra.mxu0 0.0
          %333 = vmatpush.msra.mxu0 0.0
          %334 = vmatpush.msra.mxu0 0.0
          %335 = vmatpush.msra.mxu0 0.0
          %v336 = vand.u32 %v190, 4294901760
          %v337 = vsub.f32 %v190, %v336
          %v338 = vand.u32 %v337, 4294901760
          %339 = vmatpush.msra.mxu0 %v338
          %v340 = vand.u32 %v193, 4294901760
          %341 = vmatmul.f32.gmra.mxu0 %v340
          %v342 = vpop.f32.mrf.mxu0
          %v343 = vadd.f32 %v313, %v342
          %v344 = vand.u32 %v196, 4294901760
          %345 = vmatmul.f32.gmra.mxu0 %v344
          %v346 = vpop.f32.mrf.mxu0
          %v347 = vadd.f32 %v319, %v346
          %348 = vdwg.mxu0
          %349 = vmatpush.msra.mxu0 0.0
          %350 = vmatpush.msra.mxu0 0.0
          %351 = vmatpush.msra.mxu0 0.0
          %352 = vmatpush.msra.mxu0 0.0
          %353 = vmatpush.msra.mxu0 0.0
          %354 = vmatpush.msra.mxu0 0.0
          %355 = vmatpush.msra.mxu0 0.0
          %356 = vmatpush.msra.mxu0 0.0
          %357 = vmatpush.msra.mxu0 0.0
          %358 = vmatpush.msra.mxu0 0.0
          %359 = vmatpush.msra.mxu0 0.0
          %360 = vmatpush.msra.mxu0 0.0
          %361 = vmatpush.msra.mxu0 0.0
          %362 = vmatpush.msra.mxu0 0.0
          %363 = vmatpush.msra.mxu0 0.0
          %v364 = vand.u32 %v190, 4294901760
          %365 = vmatpush.msra.mxu0 %v364
          %v366 = vand.u32 %v193, 4294901760
          %367 = vmatmul.f32.gmra.mxu0 %v366
          %v368 = vpop.f32.mrf.mxu0
          %v369 = vadd.f32 %v343, %v368
          %v370 = vand.u32 %v196, 4294901760
          %371 = vmatmul.f32.gmra.mxu0 %v370
          %v372 = vpop.f32.mrf.mxu0
          %v373 = vadd.f32 %v347, %v372
          %374 = vdwg.mxu0
          %v375 = vand.u32 2147483647, %v369
          %vm376 = vcmp.le.f32.partialorder %v375, 0.7853982
          %vm377 = vcmp.lt.s32.totalorder %v369, 0
          %v378 = vand.u32 %v369, 2139095040
          %v379 = vshrl.u32 %v378, 23
          %v380 = vsub.s32 %v379, 127
          %v381 = vand.u32 2147483647, %v369
          %v382 = vand.u32 %v381, 8388607
          %v383 = vor.u32 %v382, 8388608
          %v384 = vsub.s32 0, %v383
          %v385 = vadd.s32 %v380, 1
          %vm386 = vcmp.gt.s32.totalorder %v385, 0
          %v387 = vsel %vm386, %v385, 0
          %v388 = vshrl.u32 %v387, 5
          %v389 = vand.u32 %v387, 31
          %v390 = vsub.s32 32, %v389
          %v391 = vshrl.u32 683565275, %v390
          %v392 = vshll.u32 683565275, %v389
          %v393 = vshrl.u32 2475754826, %v390
          %v394 = vor.u32 %v392, %v393
          %v395 = vshll.u32 2475754826, %v389
          %v396 = vshrl.u32 2131351028, %v390
          %v397 = vor.u32 %v395, %v396
          %v398 = vshll.u32 2131351028, %v389
          %v399 = vshrl.u32 2102212464, %v390
          %v400 = vor.u32 %v398, %v399
          %v401 = vshll.u32 2102212464, %v389
          %v402 = vshrl.u32 920167782, %v390
          %v403 = vor.u32 %v401, %v402
          %v404 = vshll.u32 920167782, %v389
          %v405 = vshrl.u32 1326507024, %v390
          %v406 = vor.u32 %v404, %v405
          %vm407 = vcmp.lt.s32.totalorder %v388, 1
          %vm408 = vcmp.lt.s32.totalorder %v388, 2
          %vm409 = vcmp.lt.s32.totalorder %v388, 3
          %vm410 = vcmp.lt.s32.totalorder %v388, 4
          %v411 = vsel %vm407, %v391, %v394
          %v412 = vsel %vm410, %v400, 2102212464
          %v413 = vsel %vm409, %v397, %v412
          %v414 = vsel %vm408, %v411, %v413
          %v415 = vsel %vm407, %v394, %v397
          %v416 = vsel %vm410, %v403, 920167782
          %v417 = vsel %vm409, %v400, %v416
          %v418 = vsel %vm408, %v415, %v417
          %v419 = vsel %vm407, %v397, %v400
          %v420 = vsel %vm410, %v406, 1326507024
          %v421 = vsel %vm409, %v403, %v420
          %v422 = vsel %vm408, %v419, %v421
          %v423 = vshll.u32 %v383, 8
          %v424 = vand.u32 %v423, 65535
          %v425 = vshrl.u32 %v423, 16
          %v426 = vand.u32 %v422, 65535
          %v427 = vshrl.u32 %v422, 16
          %v428 = vmul.u32 %v424, %v426
          %v429 = vmul.u32 %v424, %v427
          %v430 = vmul.u32 %v425, %v426
          %v431 = vmul.u32 %v425, %v427
          %v432 = vshll.u32 %v429, 16
          %v433 = vshrl.u32 %v429, 16
          %v434 = vshll.u32 %v430, 16
          %v435 = vshrl.u32 %v430, 16
          %vm436 = vc.u32 %v428, %v432
          %v437 = vsel %vm436, 1, 0
          %v438 = vadd.s32 %v428, %v432
          %v439 = vadd.s32 %v431, %v437
          %vm440 = vc.u32 %v438, %v434
          %v441 = vsel %vm440, 1, 0
          %v442 = vadd.s32 %v438, %v434
          %v443 = vadd.s32 %v439, %v441
          %v444 = vadd.s32 %v443, %v433
          %v445 = vadd.s32 %v444, %v435
          %v446 = vand.u32 %v423, 65535
          %v447 = vshrl.u32 %v423, 16
          %v448 = vand.u32 %v418, 65535
          %v449 = vshrl.u32 %v418, 16
          %v450 = vmul.u32 %v446, %v448
          %v451 = vmul.u32 %v446, %v449
          %v452 = vmul.u32 %v447, %v448
          %v453 = vmul.u32 %v447, %v449
          %v454 = vshll.u32 %v451, 16
          %v455 = vshrl.u32 %v451, 16
          %v456 = vshll.u32 %v452, 16
          %v457 = vshrl.u32 %v452, 16
          %vm458 = vc.u32 %v450, %v454
          %v459 = vsel %vm458, 1, 0
          %v460 = vadd.s32 %v450, %v454
          %v461 = vadd.s32 %v453, %v459
          %vm462 = vc.u32 %v460, %v456
          %v463 = vsel %vm462, 1, 0
          %v464 = vadd.s32 %v460, %v456
          %v465 = vadd.s32 %v461, %v463
          %v466 = vadd.s32 %v465, %v455
          %v467 = vadd.s32 %v466, %v457
          %v468 = vmul.u32 %v423, %v414
          %v469 = vadd.s32 %v445, %v464
          %vm470 = vc.u32 %v445, %v464
          %v471 = vadd.s32 %v467, 1
          %v472 = vsel %vm470, %v471, %v467
          %v473 = vadd.s32 %v468, %v472
          %v474 = vadd.s32 %v473, 536870912
          %v475 = vshrl.u32 %v474, 30
          %v476 = vshll.u32 %v475, 30
          %v477 = vsub.s32 %v473, %v476
          %vm478 = vcmp.lt.s32.totalorder %v477, 0
          %v479 = vsub.s32 0, %v477
          %v480 = vsel %vm478, %v479, %v477
          %v481 = vclz %v480
          %v482 = vsub.s32 %v481, 2
          %vm483 = vcmp.gt.s32.totalorder 0, %v482
          %v484 = vsel %vm483, 0, %v482
          %v485 = vsub.s32 32, %v484
          %v486 = vshll.u32 %v477, %v484
          %v487 = vshrl.u32 %v469, %v485
          %v488 = vor.u32 %v486, %v487
          %v489 = vsub.s32 4294967266, %v484
          %v490 = vadd.s32 %v489, 127
          %v491 = vshll.u32 %v490, 23
          %v492 = vor.u32 4788187, %v491
          %v493 = vand.u32 2147483647, %v492
          %v495 = vcvt.s32.f32 %v488
          %v496 = vmul.f32 %v495, %v493
          %v497 = vxor.u32 %v496, 2147483648
          %v498 = vsel %vm377, %v497, %v496
          %v499 = vsub.s32 4, %v475
          %v500 = vsel %vm377, %v499, %v475
          %v501 = vsel %vm376, %v369, %v498
          %v502 = vsel %vm376, 0, %v500
          %v503 = vmul.f32 %v501, %v501
          %v504 = vmul.f32 %v503, -0.001358992
          %v505 = vadd.f32 %v504, 0.041655596
          %v506 = vmul.f32 %v503, %v505
          %v507 = vadd.f32 %v506, -0.4999988
          %v508 = vmul.f32 %v503, %v507
          %v509 = vadd.f32 1.0, %v508
          %v510 = vmul.f32 %v501, %v501
          %v511 = vmul.f32 %v510, -0.00019511016
          %v512 = vadd.f32 %v511, 0.008332121
          %v513 = vmul.f32 %v510, %v512
          %v514 = vadd.f32 %v513, -0.16666654
          %v515 = vmul.f32 %v510, %v514
          %v516 = vadd.f32 %v515, 1.0
          %v517 = vmul.f32 %v516, %v501
          %vm518 = vweird.f32 %v369
          %v519 = vadd.s32 %v502, 3
          %v520 = vand.u32 %v519, 3
          %vm521 = vcmp.lt.s32.totalorder %v520, 2
          %vm522 = vcmp.eq.s32.totalorder %v520, 0
          %v523 = vxor.u32 %v517, 2147483648
          %v524 = vsel %vm522, %v509, %v523
          %vm525 = vcmp.eq.s32.totalorder %v520, 2
          %v526 = vxor.u32 %v509, 2147483648
          %v527 = vsel %vm525, %v526, %v517
          %v528 = vsel %vm521, %v524, %v527
          %v529 = vsel %vm518, nan, %v528
          %v530 = vand.u32 2147483647, %v373
          %vm531 = vcmp.le.f32.partialorder %v530, 0.7853982
          %vm532 = vcmp.lt.s32.totalorder %v373, 0
          %v533 = vand.u32 %v373, 2139095040
          %v534 = vshrl.u32 %v533, 23
          %v535 = vsub.s32 %v534, 127
          %v536 = vand.u32 2147483647, %v373
          %v537 = vand.u32 %v536, 8388607
          %v538 = vor.u32 %v537, 8388608
          %v539 = vsub.s32 0, %v538
          %v540 = vadd.s32 %v535, 1
          %vm541 = vcmp.gt.s32.totalorder %v540, 0
          %v542 = vsel %vm541, %v540, 0
          %v543 = vshrl.u32 %v542, 5
          %v544 = vand.u32 %v542, 31
          %v545 = vsub.s32 32, %v544
          %v546 = vshrl.u32 683565275, %v545
          %v547 = vshll.u32 683565275, %v544
          %v548 = vshrl.u32 2475754826, %v545
          %v549 = vor.u32 %v547, %v548
          %v550 = vshll.u32 2475754826, %v544
          %v551 = vshrl.u32 2131351028, %v545
          %v552 = vor.u32 %v550, %v551
          %v553 = vshll.u32 2131351028, %v544
          %v554 = vshrl.u32 2102212464, %v545
          %v555 = vor.u32 %v553, %v554
          %v556 = vshll.u32 2102212464, %v544
          %v557 = vshrl.u32 920167782, %v545
          %v558 = vor.u32 %v556, %v557
          %v559 = vshll.u32 920167782, %v544
          %v560 = vshrl.u32 1326507024, %v545
          %v561 = vor.u32 %v559, %v560
          %vm562 = vcmp.lt.s32.totalorder %v543, 1
          %vm563 = vcmp.lt.s32.totalorder %v543, 2
          %vm564 = vcmp.lt.s32.totalorder %v543, 3
          %vm565 = vcmp.lt.s32.totalorder %v543, 4
          %v566 = vsel %vm562, %v546, %v549
          %v567 = vsel %vm565, %v555, 2102212464
          %v568 = vsel %vm564, %v552, %v567
          %v569 = vsel %vm563, %v566, %v568
          %v570 = vsel %vm562, %v549, %v552
          %v571 = vsel %vm565, %v558, 920167782
          %v572 = vsel %vm564, %v555, %v571
          %v573 = vsel %vm563, %v570, %v572
          %v574 = vsel %vm562, %v552, %v555
          %v575 = vsel %vm565, %v561, 1326507024
          %v576 = vsel %vm564, %v558, %v575
          %v577 = vsel %vm563, %v574, %v576
          %v578 = vshll.u32 %v538, 8
          %v579 = vand.u32 %v578, 65535
          %v580 = vshrl.u32 %v578, 16
          %v581 = vand.u32 %v577, 65535
          %v582 = vshrl.u32 %v577, 16
          %v583 = vmul.u32 %v579, %v581
          %v584 = vmul.u32 %v579, %v582
          %v585 = vmul.u32 %v580, %v581
          %v586 = vmul.u32 %v580, %v582
          %v587 = vshll.u32 %v584, 16
          %v588 = vshrl.u32 %v584, 16
          %v589 = vshll.u32 %v585, 16
          %v590 = vshrl.u32 %v585, 16
          %vm591 = vc.u32 %v583, %v587
          %v592 = vsel %vm591, 1, 0
          %v593 = vadd.s32 %v583, %v587
          %v594 = vadd.s32 %v586, %v592
          %vm595 = vc.u32 %v593, %v589
          %v596 = vsel %vm595, 1, 0
          %v597 = vadd.s32 %v593, %v589
          %v598 = vadd.s32 %v594, %v596
          %v599 = vadd.s32 %v598, %v588
          %v600 = vadd.s32 %v599, %v590
          %v601 = vand.u32 %v578, 65535
          %v602 = vshrl.u32 %v578, 16
          %v603 = vand.u32 %v573, 65535
          %v604 = vshrl.u32 %v573, 16
          %v605 = vmul.u32 %v601, %v603
          %v606 = vmul.u32 %v601, %v604
          %v607 = vmul.u32 %v602, %v603
          %v608 = vmul.u32 %v602, %v604
          %v609 = vshll.u32 %v606, 16
          %v610 = vshrl.u32 %v606, 16
          %v611 = vshll.u32 %v607, 16
          %v612 = vshrl.u32 %v607, 16
          %vm613 = vc.u32 %v605, %v609
          %v614 = vsel %vm613, 1, 0
          %v615 = vadd.s32 %v605, %v609
          %v616 = vadd.s32 %v608, %v614
          %vm617 = vc.u32 %v615, %v611
          %v618 = vsel %vm617, 1, 0
          %v619 = vadd.s32 %v615, %v611
          %v620 = vadd.s32 %v616, %v618
          %v621 = vadd.s32 %v620, %v610
          %v622 = vadd.s32 %v621, %v612
          %v623 = vmul.u32 %v578, %v569
          %v624 = vadd.s32 %v600, %v619
          %vm625 = vc.u32 %v600, %v619
          %v626 = vadd.s32 %v622, 1
          %v627 = vsel %vm625, %v626, %v622
          %v628 = vadd.s32 %v623, %v627
          %v629 = vadd.s32 %v628, 536870912
          %v630 = vshrl.u32 %v629, 30
          %v631 = vshll.u32 %v630, 30
          %v632 = vsub.s32 %v628, %v631
          %vm633 = vcmp.lt.s32.totalorder %v632, 0
          %v634 = vsub.s32 0, %v632
          %v635 = vsel %vm633, %v634, %v632
          %v636 = vclz %v635
          %v637 = vsub.s32 %v636, 2
          %vm638 = vcmp.gt.s32.totalorder 0, %v637
          %v639 = vsel %vm638, 0, %v637
          %v640 = vsub.s32 32, %v639
          %v641 = vshll.u32 %v632, %v639
          %v642 = vshrl.u32 %v624, %v640
          %v643 = vor.u32 %v641, %v642
          %v644 = vsub.s32 4294967266, %v639
          %v645 = vadd.s32 %v644, 127
          %v646 = vshll.u32 %v645, 23
          %v647 = vor.u32 4788187, %v646
          %v648 = vand.u32 2147483647, %v647
          %v650 = vcvt.s32.f32 %v643
          %v651 = vmul.f32 %v650, %v648
          %v652 = vxor.u32 %v651, 2147483648
          %v653 = vsel %vm532, %v652, %v651
          %v654 = vsub.s32 4, %v630
          %v655 = vsel %vm532, %v654, %v630
          %v656 = vsel %vm531, %v373, %v653
          %v657 = vsel %vm531, 0, %v655
          %v658 = vmul.f32 %v656, %v656
          %v659 = vmul.f32 %v658, -0.001358992
          %v660 = vadd.f32 %v659, 0.041655596
          %v661 = vmul.f32 %v658, %v660
          %v662 = vadd.f32 %v661, -0.4999988
          %v663 = vmul.f32 %v658, %v662
          %v664 = vadd.f32 1.0, %v663
          %v665 = vmul.f32 %v656, %v656
          %v666 = vmul.f32 %v665, -0.00019511016
          %v667 = vadd.f32 %v666, 0.008332121
          %v668 = vmul.f32 %v665, %v667
          %v669 = vadd.f32 %v668, -0.16666654
          %v670 = vmul.f32 %v665, %v669
          %v671 = vadd.f32 %v670, 1.0
          %v672 = vmul.f32 %v671, %v656
          %vm673 = vweird.f32 %v373
          %v674 = vadd.s32 %v657, 3
          %v675 = vand.u32 %v674, 3
          %vm676 = vcmp.lt.s32.totalorder %v675, 2
          %vm677 = vcmp.eq.s32.totalorder %v675, 0
          %v678 = vxor.u32 %v672, 2147483648
          %v679 = vsel %vm677, %v664, %v678
          %vm680 = vcmp.eq.s32.totalorder %v675, 2
          %v681 = vxor.u32 %v664, 2147483648
          %v682 = vsel %vm680, %v681, %v672
          %v683 = vsel %vm676, %v679, %v682
          %v684 = vsel %vm673, nan, %v683
          %685 = vst [vmem:[%s170] sm:$0xff] %v529
          %686 = vst [vmem:[%s170 + $0x8] sm:$0xff] %v684
        $region32: #{tpu_custom_call.1} parent=27 // pred_fallthru
          _
        %p687 = scmp.eq.s32.totalorder %s183, 0
        // Predicated region
        $region33: #{tpu_custom_call.1} parent=27 // pred_check
          %p688 = pneg %p687
        $region34: #{tpu_custom_call.1} parent=27 // pred_check_branch
          %690 = sbr.rel (%p688) target = $region36
        $region35: #{tpu_custom_call.1} parent=27 // pred_region
          %691 = vst [vmem:[%s170] sm:$0xff] 0.0
          %692 = vst [vmem:[%s170 + $0x8] sm:$0xff] 0.0
        $region36: #{tpu_custom_call.1} parent=27 // pred_fallthru
          _
        %s693 = sand.u32 %s96, 1
        %s694 = scalar_lea.sflag [#allocation5], %s693
        %s695 = sand.u32 %s96, 1
        %s696 = smul.addr %s695, 16
        %s697 = scalar_lea.vmem [#allocation4], %s696
        // Predicated region
        $region37: #{tpu_custom_call.1} parent=27 // pred_check
          %p698 = pneg %p106
        $region38: #{tpu_custom_call.1} parent=27 // pred_check_branch
          %700 = sbr.rel (%p698) target = $region40
        $region39: #{tpu_custom_call.1} parent=27 // pred_region
          %s701 = smul.u32 2, %s30
          %703 = vsyncadd %s694, 0
          %s704 = smul.addr %s29, 2
          %s705 = sadd.s32 %s701, %s704
          %s706 = smul.addr %s705, 8
          %s707 = scalar_lea.hbm %s3, %s706
          %s708 = sshll.u32 %s697, 4
          %s709 = int_to_ptr.vmem [resolvable:$true] %s708
          %s710 = sshll.u32 %s707, 4
          %s711 = int_to_ptr.hbm [resolvable:$true] %s710
          %716 = dma.vmem_to_hbm [thread:$0]  %s709, 256, %s711, %s694, 128, 128, 8
        $region40: #{tpu_custom_call.1} parent=27 // pred_fallthru
          _
      $region28: #{tpu_custom_call.1} parent=5 // pred_fallthru
        _
      %p717 = scmp.le.s32.totalorder 2, %s20
      // Predicated region
      $region41: #{tpu_custom_call.1} parent=5 // pred_check
        %p718 = pneg %p717
      $region42: #{tpu_custom_call.1} parent=5 // pred_check_branch
        %720 = sbr.rel (%p718) target = $region44
      $region43: #{tpu_custom_call.1} parent=5 // pred_region
        %s721 = ssub.s32 %s20, 2
        // Predicated region
        $region45: #{tpu_custom_call.1} parent=43 // pred_check
          %p722 = pneg %p112
        $region46: #{tpu_custom_call.1} parent=43 // pred_check_branch
          %724 = sbr.rel (%p722) target = $region48
        $region47: #{tpu_custom_call.1} parent=43 // pred_region
          %s725 = sand.u32 %s97, 1
          %s726 = scalar_lea.sflag [#allocation5], %s725
          %s727 = sand.u32 %s97, 1
          %s728 = smul.addr %s727, 16
          %s729 = scalar_lea.vmem [#allocation4], %s728
          %731 = dma.done %s726, 256
        $region48: #{tpu_custom_call.1} parent=43 // pred_fallthru
          _
      $region44: #{tpu_custom_call.1} parent=5 // pred_fallthru
        _
    $region6: #{tpu_custom_call.1} parent=1 // loop_footer
      %s24 = sadd.s32 1, %s20
    $region7: #{tpu_custom_call.1} parent=1 // loop_footer_branch
      %19 = sbr.rel target = $region3
    $region8: #{tpu_custom_call.1} parent=1 // loop_exit
      _
    %732 = vsyncpa [#allocation5], 1
    %s733 = scalar_lea.sflag [#allocation5], 1
    %734 = vsyncpa %s733, 1

</llo_original>
